<compile_context>
chip_gen: v5e
topology: v5e:2x2
jax: 0.10.0
libtpu: 0.0.40
codegen_flags: <defaults>
</compile_context>

<pallas_src>
import functools

import jax
import jax.numpy as jnp
from jax import lax
from jax.experimental import pallas as pl
from jax.experimental.pallas import tpu as pltpu

POWER = 2  # matches Normalize(power=2)


def _round_up(a, b):
    return pl.cdiv(a, b) * b


def _chip_params():
    """(two_tensorcores, target_block_bytes, vmem_limit_bytes) for this chip."""
    two_tc = False
    vmem_bytes = 64 * 1024 * 1024  # conservative default (v7x-sized)
    try:
        kind = jax.devices()[0].device_kind.lower()
        # v7x has 2 TCs/chip; v4/v5p megacore also shard "parallel" grid axes.
        two_tc = any(t in kind for t in ("7x", "v7", "v4", "v5p"))
    except Exception:
        pass
    try:
        vmem_bytes = int(pltpu.get_tpu_info().vmem_capacity_bytes)
    except Exception:
        pass
    # ~48 MiB scoped on 64 MiB chips (v7x), ~64 MiB on 128 MiB chips (v5e/v6e).
    vmem_limit = max(32 * 1024 * 1024, min((vmem_bytes * 3) // 4, 64 * 1024 * 1024))
    target_block = 4 * 1024 * 1024 if vmem_bytes <= 64 * 1024 * 1024 else 6 * 1024 * 1024
    return two_tc, target_block, vmem_limit


def _pick_tile_rows(n_rows, d, itemsize, *, row_mult, target_block_bytes, ncores):
    """Rows per block: as big as the byte target allows; only shrink for multi-TC."""
    bytes_per_row = max(1, d * itemsize)
    cap = max(row_mult, (target_block_bytes // bytes_per_row) // row_mult * row_mult)
    tile = min(cap, _round_up(n_rows, row_mult))
    if ncores > 1:
        # Need ~4 steps per core so both TensorCores stream and pipelines fill.
        min_steps = 4 * ncores
        while pl.cdiv(n_rows, tile) < min_steps and tile >= 2 * row_mult:
            tile = max(row_mult, ((tile // 2) // row_mult) * row_mult)
    return tile


# ----------------------------------------------------------------------------
# Main path: one streaming pass, full D per block, rows tiled.
# ----------------------------------------------------------------------------
def _normalize_kernel(x_ref, o_ref, *, power, d):
    x = x_ref[...]
    xf = x.astype(jnp.float32)

    if power == 2:
        xsq = xf * xf                                   # VPU mul, no pow path
    elif isinstance(power, int):
        xsq = lax.integer_pow(xf, power)                # stays on VPU
    else:
        xsq = xf ** power

    if d % 128 != 0:
        # Unaligned last dim: explicitly zero anything beyond the logical row
        # so the lane reduction never sees padded-lane garbage.
        col = lax.broadcasted_iota(jnp.int32, xsq.shape, 1)
        xsq = jnp.where(col < d, xsq, 0.0)

    s = jnp.sum(xsq, axis=-1, keepdims=True)            # XLU lane reduce
    if power == 2:
        inv = lax.rsqrt(s)                               # EUP slot, ~free
    else:
        inv = s ** (-1.0 / power)
    # TODO(synk): rows with zero norm produce inf/nan — identical to PyTorch.

    if x.dtype == jnp.float32:
        o_ref[...] = (xf * inv).astype(o_ref.dtype)
    else:
        # Keep the scale multiply in the native (e.g. bf16) dtype: avoids a
        # second full f32 tile for the output pass.
        o_ref[...] = (x * inv.astype(x.dtype)).astype(o_ref.dtype)


# ----------------------------------------------------------------------------
# Fallback path for very wide rows: two passes, D tiled.
# ----------------------------------------------------------------------------
def _row_pow_sum_kernel(x_ref, inv_ref, *, power, d, td):
    j = pl.program_id(1)

    @pl.when(j == 0)
    def _():
        inv_ref[...] = jnp.zeros_like(inv_ref)

    xf = x_ref[...].astype(jnp.float32)
    col = j * td + lax.broadcasted_iota(jnp.int32, xf.shape, 1)
    if power == 2:
        xsq = xf * xf
    elif isinstance(power, int):
        xsq = lax.integer_pow(xf, power)
    else:
        xsq = xf ** power
    xsq = jnp.where(col < d, xsq, 0.0)                   # mask ragged D tail
    inv_ref[...] += jnp.sum(xsq, axis=-1, keepdims=True)

    @pl.when(j == pl.num_programs(1) - 1)
    def _():
        s = inv_ref[...]
        inv_ref[...] = lax.rsqrt(s) if power == 2 else s ** (-1.0 / power)


def _scale_kernel(x_ref, inv_ref, o_ref):
    x = x_ref[...]
    inv = inv_ref[...]
    if x.dtype == jnp.float32:
        o_ref[...] = (x * inv).astype(o_ref.dtype)
    else:
        o_ref[...] = (x * inv.astype(x.dtype)).astype(o_ref.dtype)


def _pick_dtiled_tiles(n, d, itemsize, row_mult, target_block_bytes):
    tr = min(_round_up(n, row_mult), max(row_mult, 256))
    td = (target_block_bytes // max(1, tr * itemsize)) // 128 * 128
    td = max(128, min(td, _round_up(d, 128)))
    return tr, td


def _normalize_dtiled(x, *, power, row_mult, target_block_bytes, vmem_limit,
                      two_tc, tr=None, td=None):
    N, D = x.shape
    itemsize = jnp.dtype(x.dtype).itemsize
    if tr is None or td is None:
        tr0, td0 = _pick_dtiled_tiles(N, D, itemsize, row_mult, target_block_bytes)
        tr = tr if tr is not None else tr0
        td = td if td is not None else td0
    grid = (pl.cdiv(N, tr), pl.cdiv(D, td))

    inv = pl.pallas_call(
        functools.partial(_row_pow_sum_kernel, power=power, d=D, td=td),
        out_shape=jax.ShapeDtypeStruct((N, 1), jnp.float32),
        grid=grid,
        in_specs=[pl.BlockSpec((tr, td), lambda i, j: (i, j))],
        out_specs=pl.BlockSpec((tr, 1), lambda i, j: (i, 0)),
        compiler_params=pltpu.CompilerParams(
            dimension_semantics=("parallel", "arbitrary"),
            vmem_limit_bytes=vmem_limit,
        ),
    )(x)

    return pl.pallas_call(
        _scale_kernel,
        out_shape=jax.ShapeDtypeStruct((N, D), x.dtype),
        grid=grid,
        in_specs=[pl.BlockSpec((tr, td), lambda i, j: (i, j)),
                  pl.BlockSpec((tr, 1), lambda i, j: (i, 0))],
        out_specs=pl.BlockSpec((tr, td), lambda i, j: (i, j)),
        compiler_params=pltpu.CompilerParams(
            dimension_semantics=("parallel", "parallel"),
            vmem_limit_bytes=vmem_limit,
        ),
    )(x, inv)


# ----------------------------------------------------------------------------
# Public wrapper
# ----------------------------------------------------------------------------
def normalize(x, *, power=POWER):
    if x.ndim != 2:
        # PyTorch reduces dim=1 regardless of rank: move it to the lane axis,
        # flatten to 2-D, normalize, undo.  Transpose round-trip is outside the
        # kernel and only hit for >2-D inputs.
        xt = jnp.moveaxis(x, 1, -1)
        shp = xt.shape
        out = normalize(xt.reshape(-1, shp[-1]), power=power)
        return jnp.moveaxis(out.reshape(shp), -1, 1)

    N, D = x.shape
    itemsize = jnp.dtype(x.dtype).itemsize
    row_mult = {1: 32, 2: 16}.get(itemsize, 8)          # sublane packing per dtype
    two_tc, target_block_bytes, vmem_limit = _chip_params()
    ncores = 2 if two_tc else 1

    Dp = _round_up(D, 128)

    def vmem_need(rows):
        # 2x in + 2x out double buffers (native dtype) + ~2 f32-tile intermediates
        return rows * (4 * D * itemsize + 2 * Dp * 4)

    if vmem_need(row_mult) > (vmem_limit * 3) // 4:
        # Even the minimum full-row block would blow VMEM: two-pass D-tiled path.
        return _normalize_dtiled(x, power=power, row_mult=row_mult,
                                 target_block_bytes=target_block_bytes,
                                 vmem_limit=vmem_limit, two_tc=two_tc)

    tile_rows = _pick_tile_rows(N, D, itemsize, row_mult=row_mult,
                                target_block_bytes=target_block_bytes,
                                ncores=ncores)
    while tile_rows > row_mult and vmem_need(tile_rows) > (vmem_limit * 3) // 4:
        tile_rows = max(row_mult, ((tile_rows // 2) // row_mult) * row_mult)

    return pl.pallas_call(
        functools.partial(_normalize_kernel, power=power, d=D),
        out_shape=jax.ShapeDtypeStruct((N, D), x.dtype),
        grid=(pl.cdiv(N, tile_rows),),                   # ragged tail handled by Pallas
        in_specs=[pl.BlockSpec((tile_rows, D), lambda i: (i, 0))],
        out_specs=pl.BlockSpec((tile_rows, D), lambda i: (i, 0)),
        compiler_params=pltpu.CompilerParams(
            dimension_semantics=("parallel",),           # row blocks shard across TCs on v7x
            vmem_limit_bytes=vmem_limit,
        ),
    )(x)


def _ref_normalize(x, power=POWER):
    norm = jnp.sum(x.astype(jnp.float32) ** power, axis=1, keepdims=True) ** (1.0 / power)
    return (x.astype(jnp.float32) / norm).astype(x.dtype)


if __name__ == "__main__":
    key = jax.random.PRNGKey(0)

    # 1) aligned f32
    x = jax.random.normal(key, (16, 256), dtype=jnp.float32)
    out = jax.block_until_ready(normalize(x))
    assert out.shape == x.shape and out.dtype == x.dtype
    assert jnp.allclose(out, _ref_normalize(x), atol=1e-5, rtol=1e-5)

    # 2) ragged rows and non-128 feature dim (no pad/slice passes anymore)
    x2 = jax.random.normal(jax.random.PRNGKey(1), (13, 200), dtype=jnp.float32)
    out2 = jax.block_until_ready(normalize(x2))
    assert jnp.allclose(out2, _ref_normalize(x2), atol=1e-5, rtol=1e-5)

    # 3) bf16 path (native-dtype scale multiply, f32 accumulation)
    x3 = jax.random.normal(jax.random.PRNGKey(2), (32, 384), dtype=jnp.bfloat16)
    out3 = jax.block_until_ready(normalize(x3))
    assert out3.dtype == jnp.bfloat16
    assert jnp.allclose(out3.astype(jnp.float32),
                        _ref_normalize(x3).astype(jnp.float32),
                        atol=3e-2, rtol=3e-2)

    # 4) 4-D input, dim=1 reduction (conv-style feature maps)
    x4 = jax.random.normal(jax.random.PRNGKey(3), (2, 4, 8, 8), dtype=jnp.float32)
    out4 = jax.block_until_ready(normalize(x4))
    norm4 = jnp.sum(x4 ** 2, axis=1, keepdims=True) ** 0.5
    assert jnp.allclose(out4, x4 / norm4, atol=1e-5, rtol=1e-5)

    # 5) force the D-tiled two-pass fallback with tiny tiles to validate it
    x5 = jax.random.normal(jax.random.PRNGKey(4), (13, 300), dtype=jnp.float32)
    out5 = jax.block_until_ready(
        _normalize_dtiled(x5, power=2, row_mult=8, target_block_bytes=1 << 20,
                          vmem_limit=32 * 1024 * 1024, two_tc=False, tr=8, td=128))
    assert jnp.allclose(out5, _ref_normalize(x5), atol=1e-5, rtol=1e-5)

    # 6) power != 2 (integer_pow path); positive inputs keep the root real
    x6 = jnp.abs(jax.random.normal(jax.random.PRNGKey(5), (9, 160), dtype=jnp.float32)) + 0.5
    out6 = jax.block_until_ready(normalize(x6, power=3))
    norm6 = jnp.sum(x6 ** 3, axis=1, keepdims=True) ** (1.0 / 3.0)
    assert jnp.allclose(out6, x6 / norm6, atol=1e-4, rtol=1e-4)

    print("KERNEL_OK")
</pallas_src>

<mosaic_0001>
module attributes {stable_mosaic.version = 11 : i64} {
  func.func @_normalize_kernel(%arg0: i32, %arg1: memref<16x256xf32, #tpu.memory_space<vmem>>, %arg2: memref<16x256xf32, #tpu.memory_space<vmem>>) attributes {dimension_semantics = [#tpu.dimension_semantics<parallel>], iteration_bounds = array<i64: 1>, scalar_prefetch = 0 : i64, scratch_operands = 0 : i64, tpu.core_type = #tpu.core_type<tc>, window_params = [{transform_indices = @transform_0, window_bounds = array<i64: 16, 256>}, {transform_indices = @transform_1, window_bounds = array<i64: 16, 256>}]} {
    %c0 = arith.constant 0 : index
    %c0_0 = arith.constant 0 : index
    %0 = vector.load %arg1[%c0, %c0_0] : memref<16x256xf32, #tpu.memory_space<vmem>>, vector<16x256xf32>
    %1 = arith.mulf %0, %0 : vector<16x256xf32>
    %cst = arith.constant dense<0.000000e+00> : vector<16xf32>
    %2 = vector.multi_reduction <add>, %1, %cst [1] : vector<16x256xf32> to vector<16xf32>
    %3 = vector.shape_cast %2 : vector<16xf32> to vector<16x1xf32>
    %4 = math.rsqrt %3 : vector<16x1xf32>
    %5 = vector.broadcast %4 : vector<16x1xf32> to vector<16x256xf32>
    %6 = arith.mulf %0, %5 : vector<16x256xf32>
    %c0_1 = arith.constant 0 : index
    %c0_2 = arith.constant 0 : index
    %7 = vector.load %arg2[%c0_1, %c0_2] : memref<16x256xf32, #tpu.memory_space<vmem>>, vector<16x256xf32>
    tpu.vector_store %arg2[%c0_1, %c0_2], %6 {strides = array<i32>} : memref<16x256xf32, #tpu.memory_space<vmem>>, vector<16x256xf32>,
    return
  }
  func.func @transform_0(%arg0: i32) -> (i32, i32) {
    %c0_i32 = arith.constant 0 : i32
    %c0_i32_0 = arith.constant 0 : i32
    return %arg0, %c0_i32 : i32, i32
  }
  func.func @transform_1(%arg0: i32) -> (i32, i32) {
    %c0_i32 = arith.constant 0 : i32
    %c0_i32_0 = arith.constant 0 : i32
    return %arg0, %c0_i32 : i32, i32
  }
}

</mosaic_0001>

<llo_original>
// kernel: tpu_custom_call.1
$region0: #{tpu_custom_call.1}
  #allocation0 [shape = 'u32[]', space=smem, size = 0x4, offset = 0x4, fixed_abs, tag = 'smem constant byte address 0x4 - core index']
  #allocation1 [shape = 'u32[72,128]{1,0:T(1,128)}', space=vmem, size = 0x9000, scoped, tag = 'internal scratch']
  %s0 = inlined_call_operand.hbm [shape: f32[16,256], index: 0, kind: input, shape index: {}]
  %s1 = inlined_call_operand.hbm [shape: f32[16,256], index: 1, kind: output, shape index: {}]
  %s2 = sld [smem:[#allocation0]]
  $region18: #{tpu_custom_call.1} parent=0
    _
  %s4 = ssub.s32 1, %s2
  %s5 = scalar_select 0, %s4, %s2
  $region1: #{tpu_custom_call.1} parent=0
    #allocation2 [shape = 'u8[16384]{0}', space=vmem, size = 0x4000, scoped, tag = 'input window, operand 0, single buffered']
    #allocation3 [shape = 's32[1]{0}', space=sflag, size = 0x4, scoped, tag = 'scoped memory for tpu_custom_call.1']
    #allocation4 [shape = 's32[1]{0}', space=sflag, size = 0x4, scoped, tag = 'scoped memory for tpu_custom_call.1']
    #allocation5 [shape = 'u8[16384]{0}', space=vmem, size = 0x4000, scoped, tag = 'output window, operand 0, single buffered']
    %6 = vsyncpa [#allocation3], 0
    %7 = vsyncpa [#allocation4], 0
    // Predicated region
    $region2: #{tpu_custom_call.1} parent=1 // pred_check
      _
    $region3: #{tpu_custom_call.1} parent=1 // pred_check_branch
      %9 = sbr.rel (0) target = $region5
    $region4: #{tpu_custom_call.1} parent=1 // pred_region
      %11 = vsyncadd [#allocation3], 0
      %s12 = sshll.u32 %s0, 4
      %s13 = int_to_ptr.hbm [resolvable:$true] %s12
      %s14 = sshll.u32 [#allocation2], 4
      %s15 = int_to_ptr.vmem [resolvable:$true] %s14
      %20 = dma.hbm_to_vmem [thread:$0]  %s13, 512, %s15, [#allocation3], 256, 256, 16
    $region5: #{tpu_custom_call.1} parent=1 // pred_fallthru
      _
    // Predicated region
    $region6: #{tpu_custom_call.1} parent=1 // pred_check
      _
    $region7: #{tpu_custom_call.1} parent=1 // pred_check_branch
      %22 = sbr.rel (0) target = $region9
    $region8: #{tpu_custom_call.1} parent=1 // pred_region
      %24 = dma.done [#allocation3], 512
    $region9: #{tpu_custom_call.1} parent=1 // pred_fallthru
      _
    %v25 = vld [vmem:[#allocation2] sm:$0xff]
    %v26 = vld [vmem:[#allocation2 + $0x8] sm:$0xff]
    %v27 = vld [vmem:[#allocation2 + $0x10] sm:$0xff]
    %v28 = vld [vmem:[#allocation2 + $0x18] sm:$0xff]
    %v29 = vmul.f32 %v25, %v25
    %v30 = vmul.f32 %v26, %v26
    %v31 = vmul.f32 %v27, %v27
    %v32 = vmul.f32 %v28, %v28
    %v33 = vadd.f32 %v29, %v30
    %34 = vadd.xlane.f32.xlu0 %v33
    %v35 = vpop.xlane.xlu0 %34
    %v36 = vadd.f32 %v31, %v32
    %37 = vadd.xlane.f32.xlu0 %v36
    %v38 = vpop.xlane.xlu0 %37
    %v39 = vrsqrt.pop %v35
    %v40 = vmul.f32 %v39, %v35
    %v41 = vmul.f32 %v40, %v39
    %v42 = vmul.f32 0.5, %v41
    %v43 = vsub.f32 1.5, %v42
    %v44 = vmul.f32 %v39, %v43
    %vm45 = vweird.f32 %v35
    %vm46 = vweird.f32 %v39
    %vm47 = vmor %vm45, %vm46
    %v48 = vsel %vm47, %v39, %v44
    %v49 = vrsqrt.pop %v38
    %v50 = vmul.f32 %v49, %v38
    %v51 = vmul.f32 %v50, %v49
    %v52 = vmul.f32 0.5, %v51
    %v53 = vsub.f32 1.5, %v52
    %v54 = vmul.f32 %v49, %v53
    %vm55 = vweird.f32 %v38
    %vm56 = vweird.f32 %v49
    %vm57 = vmor %vm55, %vm56
    %v58 = vsel %vm57, %v49, %v54
    %v59 = vmul.f32 %v25, %v48
    %v60 = vmul.f32 %v26, %v48
    %v61 = vmul.f32 %v27, %v58
    %v62 = vmul.f32 %v28, %v58
    %63 = vst [vmem:[#allocation5] sm:$0xff] %v59
    %64 = vst [vmem:[#allocation5 + $0x8] sm:$0xff] %v60
    %65 = vst [vmem:[#allocation5 + $0x10] sm:$0xff] %v61
    %66 = vst [vmem:[#allocation5 + $0x18] sm:$0xff] %v62
    // Predicated region
    $region10: #{tpu_custom_call.1} parent=1 // pred_check
      _
    $region11: #{tpu_custom_call.1} parent=1 // pred_check_branch
      %68 = sbr.rel (0) target = $region13
    $region12: #{tpu_custom_call.1} parent=1 // pred_region
      %70 = vsyncadd [#allocation4], 0
      %s71 = sshll.u32 [#allocation5], 4
      %s72 = int_to_ptr.vmem [resolvable:$true] %s71
      %s73 = sshll.u32 %s1, 4
      %s74 = int_to_ptr.hbm [resolvable:$true] %s73
      %79 = dma.vmem_to_hbm [thread:$0]  %s72, 512, %s74, [#allocation4], 256, 256, 16
    $region13: #{tpu_custom_call.1} parent=1 // pred_fallthru
      _
    // Predicated region
    $region14: #{tpu_custom_call.1} parent=1 // pred_check
      _
    $region15: #{tpu_custom_call.1} parent=1 // pred_check_branch
      %81 = sbr.rel (0) target = $region17
    $region16: #{tpu_custom_call.1} parent=1 // pred_region
      %83 = dma.done [#allocation4], 512
    $region17: #{tpu_custom_call.1} parent=1 // pred_fallthru
      _
    %84 = vsyncpa [#allocation3], 1
    %85 = vsyncpa [#allocation4], 1

</llo_original>
